<compile_context>
chip_gen: v7x
topology: tpu7x:2x2x1
jax: 0.10.0
libtpu: 0.0.40
codegen_flags: <defaults>
</compile_context>

<pallas_src>
import jax
import jax.numpy as jnp
from jax.experimental import pallas as pl
from jax.experimental.pallas import tpu as pltpu

MOVE_DIM = 5          # move_only == False  =>  move_dim = 5
NEG_INF = -1e9


def qnet_kernel(x_ref, enemy_ref, mask_ref,
                wfused_ref, b1_ref, w2_ref, b2_ref, seg_ref,
                o_ref):
    EF = seg_ref.shape[0]          # E * F
    H = b1_ref.shape[1]

    x = x_ref[...]                                                     # [T, F] bf16

    # Single fused shared-LHS matmul:  x @ [ M-replicated | w1 ]  -> [T, EF + H] f32
    xw = jnp.dot(x, wfused_ref[...], preferred_element_type=jnp.float32)
    xM_rep = xw[:, :EF]            # [T, E*F] == (x @ wq @ wk.T) replicated per enemy slot
    h_pre = xw[:, EF:EF + H]       # [T, H]

    # ---- MoveModule: 2-layer MLP -> [T, MOVE_DIM] ----
    h = jnp.maximum(h_pre + b1_ref[...], 0.0)
    move = jnp.dot(h, w2_ref[...], preferred_element_type=jnp.float32) + b2_ref[...]

    # ---- AttackModule: bilinear ally/enemy score -> [T, E] ----
    # attack[t, e] = sum_f (x @ M)[t, f] * enemy[t, e, f]; segmented reduce via MXU.
    prod = enemy_ref[...].astype(jnp.float32) * xM_rep                 # [T, E*F]
    attack = jnp.dot(prod, seg_ref[...], preferred_element_type=jnp.float32)  # [T, E]
    attack = jnp.where(mask_ref[...] > 0, attack, NEG_INF)

    # ---- qs = [hold | move | attack], written directly into lane ranges ----
    T = x.shape[0]
    o_ref[:, 0:1] = jnp.zeros((T, 1), jnp.float32)
    o_ref[:, 1:1 + MOVE_DIM] = move
    o_ref[:, 1 + MOVE_DIM:] = attack


def _pick_tile(n, max_tile=512):
    """Largest multiple-of-8 divisor of n <= max_tile, preferring >=2 grid steps."""
    cands = [t for t in range(8, min(n, max_tile) + 1, 8) if n % t == 0]
    if not cands:
        return n
    multi = [t for t in cands if n // t >= 2]
    return max(multi) if multi else max(cands)


def qnet_forward(x, enemy, mask, params, *, tile=None):
    """x: [N, F], enemy: [N, E, F], mask: [N, E] -> qs: [N, 1+MOVE_DIM+E]."""
    N, F = x.shape
    E = enemy.shape[1]
    H = params["w1"].shape[1]
    EF = E * F
    out_dim = 1 + MOVE_DIM + E

    assert N % 8 == 0, "pad N (number of nodes) to a multiple of 8"
    if tile is None:
        tile = _pick_tile(N)
    assert N % tile == 0

    # ---- host-side (traced, one-time) weight prep ----
    # Bilinear weight M = wq @ wk.T, replicated once per enemy slot, fused with w1.
    M = jnp.dot(params["wq"], params["wk"].T)                 # [F, F]
    M_rep = jnp.tile(M, (1, E))                               # [F, E*F]
    w_fused = jnp.concatenate([M_rep, params["w1"]], axis=1)  # [F, E*F + H]
    w_fused = w_fused.astype(jnp.bfloat16)

    # Segment-sum matrix: seg[e*F + f, e'] = 1 iff e == e'.
    seg = (jnp.arange(EF)[:, None] // F == jnp.arange(E)[None, :]).astype(jnp.float32)

    # bf16 transport for the two large per-row streams (f32 accumulation in-kernel).
    x_bf16 = x.astype(jnp.bfloat16)
    enemy_flat = enemy.reshape(N, EF).astype(jnp.bfloat16)    # lane-dense [N, E*F]

    return pl.pallas_call(
        qnet_kernel,
        out_shape=jax.ShapeDtypeStruct((N, out_dim), jnp.float32),
        grid=(N // tile,),
        in_specs=[
            pl.BlockSpec((tile, F), lambda i: (i, 0)),          # x
            pl.BlockSpec((tile, EF), lambda i: (i, 0)),         # enemy (flattened)
            pl.BlockSpec((tile, E), lambda i: (i, 0)),          # mask
            pl.BlockSpec((F, EF + H), lambda i: (0, 0)),        # fused [M_rep | w1]
            pl.BlockSpec((1, H), lambda i: (0, 0)),             # b1
            pl.BlockSpec((H, MOVE_DIM), lambda i: (0, 0)),      # w2
            pl.BlockSpec((1, MOVE_DIM), lambda i: (0, 0)),      # b2
            pl.BlockSpec((EF, E), lambda i: (0, 0)),            # segment-sum matrix
        ],
        out_specs=pl.BlockSpec((tile, out_dim), lambda i: (i, 0)),
        compiler_params=pltpu.CompilerParams(
            dimension_semantics=("parallel",)),
    )(x_bf16, enemy_flat, mask,
      w_fused, params["b1"], params["w2"], params["b2"], seg)


def qnet_reference(x, enemy, mask, params):
    h = jnp.maximum(x @ params["w1"] + params["b1"], 0.0)
    move = h @ params["w2"] + params["b2"]
    q = x @ params["wq"]
    k = jnp.einsum("nef,fd->ned", enemy, params["wk"])
    attack = jnp.einsum("nd,ned->ne", q, k)
    attack = jnp.where(mask > 0, attack, NEG_INF)
    hold = jnp.zeros((x.shape[0], 1), jnp.float32)
    return jnp.concatenate([hold, move, attack], axis=-1)


if __name__ == "__main__":
    # Small shapes consistent with the forward pass.
    N, F, H, D, E = 256, 32, 32, 16, 8    # nodes, feat, hidden, proj, max enemies

    key = jax.random.PRNGKey(0)
    ks = jax.random.split(key, 8)

    x = jax.random.normal(ks[0], (N, F), jnp.float32)
    enemy = jax.random.normal(ks[1], (N, E, F), jnp.float32)
    # deterministic validity mask: first (n % E)+1 enemies valid per node
    mask = (jnp.arange(E)[None, :] <= (jnp.arange(N)[:, None] % E)).astype(jnp.float32)

    scale = 0.1
    params = {
        "w1": scale * jax.random.normal(ks[2], (F, H), jnp.float32),
        "b1": jnp.zeros((1, H), jnp.float32),
        "w2": scale * jax.random.normal(ks[3], (H, MOVE_DIM), jnp.float32),
        "b2": jnp.zeros((1, MOVE_DIM), jnp.float32),
        "wq": scale * jax.random.normal(ks[4], (F, D), jnp.float32),
        "wk": scale * jax.random.normal(ks[5], (F, D), jnp.float32),
    }

    qs = qnet_forward(x, enemy, mask, params)
    jax.block_until_ready(qs)

    qs_ref = qnet_reference(x, enemy, mask, params)
    assert qs.shape == (N, 1 + MOVE_DIM + E)
    # bf16 transport of x/enemy/weights -> compare against the f32 reference loosely.
    assert jnp.allclose(qs, qs_ref, atol=5e-2, rtol=5e-2)

    print("KERNEL_OK")
</pallas_src>

<mosaic_0001>
module attributes {stable_mosaic.version = 11 : i64} {
  func.func @qnet_kernel(%arg0: i32, %arg1: memref<128x32xbf16, #tpu.memory_space<vmem>>, %arg2: memref<128x256xbf16, #tpu.memory_space<vmem>>, %arg3: memref<128x8xf32, #tpu.memory_space<vmem>>, %arg4: memref<32x288xbf16, #tpu.memory_space<vmem>>, %arg5: memref<1x32xf32, #tpu.memory_space<vmem>>, %arg6: memref<32x5xf32, #tpu.memory_space<vmem>>, %arg7: memref<1x5xf32, #tpu.memory_space<vmem>>, %arg8: memref<256x8xf32, #tpu.memory_space<vmem>>, %arg9: memref<128x14xf32, #tpu.memory_space<vmem>>) attributes {dimension_semantics = [#tpu.dimension_semantics<parallel>], iteration_bounds = array<i64: 2>, scalar_prefetch = 0 : i64, scratch_operands = 0 : i64, tpu.core_type = #tpu.core_type<tc>, window_params = [{transform_indices = @transform_0, window_bounds = array<i64: 128, 32>}, {transform_indices = @transform_1, window_bounds = array<i64: 128, 256>}, {transform_indices = @transform_2, window_bounds = array<i64: 128, 8>}, {pipeline_mode = #tpu.pipeline_mode<synchronous>, transform_indices = @transform_3, window_bounds = array<i64: 32, 288>}, {pipeline_mode = #tpu.pipeline_mode<synchronous>, transform_indices = @transform_4, window_bounds = array<i64: 1, 32>}, {pipeline_mode = #tpu.pipeline_mode<synchronous>, transform_indices = @transform_5, window_bounds = array<i64: 32, 5>}, {pipeline_mode = #tpu.pipeline_mode<synchronous>, transform_indices = @transform_6, window_bounds = array<i64: 1, 5>}, {pipeline_mode = #tpu.pipeline_mode<synchronous>, transform_indices = @transform_7, window_bounds = array<i64: 256, 8>}, {transform_indices = @transform_8, window_bounds = array<i64: 128, 14>}]} {
    %c0 = arith.constant 0 : index
    %c0_0 = arith.constant 0 : index
    %0 = vector.load %arg1[%c0, %c0_0] : memref<128x32xbf16, #tpu.memory_space<vmem>>, vector<128x32xbf16>
    %c0_1 = arith.constant 0 : index
    %c0_2 = arith.constant 0 : index
    %1 = vector.load %arg4[%c0_1, %c0_2] : memref<32x288xbf16, #tpu.memory_space<vmem>>, vector<32x288xbf16>
    %cst = arith.constant dense<0.000000e+00> : vector<128x288xf32>
    %2 = tpu.matmul %0, %1, %cst {dimension_numbers = #tpu.dot_dimension_numbers<[1], [0], [0], [1], [0, 0, 1, 1], [], []>} : vector<128x32xbf16>, vector<32x288xbf16>, vector<128x288xf32> -> vector<128x288xf32>
    %3 = vector.extract_strided_slice %2 {offsets = [0, 0], sizes = [128, 256], strides = [1, 1]} : vector<128x288xf32> to vector<128x256xf32>
    %4 = vector.extract_strided_slice %2 {offsets = [0, 256], sizes = [128, 32], strides = [1, 1]} : vector<128x288xf32> to vector<128x32xf32>
    %c0_3 = arith.constant 0 : index
    %c0_4 = arith.constant 0 : index
    %5 = vector.load %arg5[%c0_3, %c0_4] : memref<1x32xf32, #tpu.memory_space<vmem>>, vector<1x32xf32>
    %6 = vector.broadcast %5 : vector<1x32xf32> to vector<128x32xf32>
    %7 = arith.addf %4, %6 : vector<128x32xf32>
    %cst_5 = arith.constant 0.000000e+00 : f32
    %8 = vector.broadcast %cst_5 : f32 to vector<128x32xf32>
    %9 = arith.maximumf %7, %8 : vector<128x32xf32>
    %c0_6 = arith.constant 0 : index
    %c0_7 = arith.constant 0 : index
    %10 = vector.load %arg6[%c0_6, %c0_7] : memref<32x5xf32, #tpu.memory_space<vmem>>, vector<32x5xf32>
    %cst_8 = arith.constant dense<0.000000e+00> : vector<128x5xf32>
    %11 = tpu.matmul %9, %10, %cst_8 {dimension_numbers = #tpu.dot_dimension_numbers<[1], [0], [0], [1], [0, 0, 1, 1], [], []>} : vector<128x32xf32>, vector<32x5xf32>, vector<128x5xf32> -> vector<128x5xf32>
    %c0_9 = arith.constant 0 : index
    %c0_10 = arith.constant 0 : index
    %12 = vector.load %arg7[%c0_9, %c0_10] : memref<1x5xf32, #tpu.memory_space<vmem>>, vector<1x5xf32>
    %13 = vector.broadcast %12 : vector<1x5xf32> to vector<128x5xf32>
    %14 = arith.addf %11, %13 : vector<128x5xf32>
    %c0_11 = arith.constant 0 : index
    %c0_12 = arith.constant 0 : index
    %15 = vector.load %arg2[%c0_11, %c0_12] : memref<128x256xbf16, #tpu.memory_space<vmem>>, vector<128x256xbf16>
    %16 = arith.extf %15 : vector<128x256xbf16> to vector<128x256xf32>
    %17 = arith.mulf %16, %3 : vector<128x256xf32>
    %c0_13 = arith.constant 0 : index
    %c0_14 = arith.constant 0 : index
    %18 = vector.load %arg8[%c0_13, %c0_14] : memref<256x8xf32, #tpu.memory_space<vmem>>, vector<256x8xf32>
    %cst_15 = arith.constant dense<0.000000e+00> : vector<128x8xf32>
    %19 = tpu.matmul %17, %18, %cst_15 {dimension_numbers = #tpu.dot_dimension_numbers<[1], [0], [0], [1], [0, 0, 1, 1], [], []>} : vector<128x256xf32>, vector<256x8xf32>, vector<128x8xf32> -> vector<128x8xf32>
    %c0_16 = arith.constant 0 : index
    %c0_17 = arith.constant 0 : index
    %20 = vector.load %arg3[%c0_16, %c0_17] : memref<128x8xf32, #tpu.memory_space<vmem>>, vector<128x8xf32>
    %cst_18 = arith.constant 0.000000e+00 : f32
    %21 = vector.broadcast %cst_18 : f32 to vector<128x8xf32>
    %22 = arith.cmpf ogt, %20, %21 : vector<128x8xf32>
    %cst_19 = arith.constant -1.000000e+09 : f32
    %23 = vector.broadcast %cst_19 : f32 to vector<128x8xf32>
    %24 = arith.select %22, %19, %23 : vector<128x8xi1>, vector<128x8xf32>
    %cst_20 = arith.constant 0.000000e+00 : f32
    %25 = vector.broadcast %cst_20 : f32 to vector<128x1xf32>
    %c0_21 = arith.constant 0 : index
    %c0_22 = arith.constant 0 : index
    %26 = vector.load %arg9[%c0_21, %c0_22] : memref<128x14xf32, #tpu.memory_space<vmem>>, vector<128x1xf32>
    tpu.vector_store %arg9[%c0_21, %c0_22], %25 {strides = array<i32>} : memref<128x14xf32, #tpu.memory_space<vmem>>, vector<128x1xf32>,
    %c0_23 = arith.constant 0 : index
    %c1 = arith.constant 1 : index
    %27 = vector.load %arg9[%c0_23, %c1] : memref<128x14xf32, #tpu.memory_space<vmem>>, vector<128x5xf32>
    tpu.vector_store %arg9[%c0_23, %c1], %14 {strides = array<i32>} : memref<128x14xf32, #tpu.memory_space<vmem>>, vector<128x5xf32>,
    %c0_24 = arith.constant 0 : index
    %c6 = arith.constant 6 : index
    %28 = vector.load %arg9[%c0_24, %c6] : memref<128x14xf32, #tpu.memory_space<vmem>>, vector<128x8xf32>
    tpu.vector_store %arg9[%c0_24, %c6], %24 {strides = array<i32>} : memref<128x14xf32, #tpu.memory_space<vmem>>, vector<128x8xf32>,
    return
  }
  func.func @transform_0(%arg0: i32) -> (i32, i32) {
    %c0_i32 = arith.constant 0 : i32
    %c0_i32_0 = arith.constant 0 : i32
    return %arg0, %c0_i32 : i32, i32
  }
  func.func @transform_1(%arg0: i32) -> (i32, i32) {
    %c0_i32 = arith.constant 0 : i32
    %c0_i32_0 = arith.constant 0 : i32
    return %arg0, %c0_i32 : i32, i32
  }
  func.func @transform_2(%arg0: i32) -> (i32, i32) {
    %c0_i32 = arith.constant 0 : i32
    %c0_i32_0 = arith.constant 0 : i32
    return %arg0, %c0_i32 : i32, i32
  }
  func.func @transform_3(%arg0: i32) -> (i32, i32) {
    %c0_i32 = arith.constant 0 : i32
    %c0_i32_0 = arith.constant 0 : i32
    %c0_i32_1 = arith.constant 0 : i32
    return %c0_i32, %c0_i32_0 : i32, i32
  }
  func.func @transform_4(%arg0: i32) -> (i32, i32) {
    %c0_i32 = arith.constant 0 : i32
    %c0_i32_0 = arith.constant 0 : i32
    %c0_i32_1 = arith.constant 0 : i32
    return %c0_i32, %c0_i32_0 : i32, i32
  }
  func.func @transform_5(%arg0: i32) -> (i32, i32) {
    %c0_i32 = arith.constant 0 : i32
    %c0_i32_0 = arith.constant 0 : i32
    %c0_i32_1 = arith.constant 0 : i32
    return %c0_i32, %c0_i32_0 : i32, i32
  }
  func.func @transform_6(%arg0: i32) -> (i32, i32) {
    %c0_i32 = arith.constant 0 : i32
    %c0_i32_0 = arith.constant 0 : i32
    %c0_i32_1 = arith.constant 0 : i32
    return %c0_i32, %c0_i32_0 : i32, i32
  }
  func.func @transform_7(%arg0: i32) -> (i32, i32) {
    %c0_i32 = arith.constant 0 : i32
    %c0_i32_0 = arith.constant 0 : i32
    %c0_i32_1 = arith.constant 0 : i32
    return %c0_i32, %c0_i32_0 : i32, i32
  }
  func.func @transform_8(%arg0: i32) -> (i32, i32) {
    %c0_i32 = arith.constant 0 : i32
    %c0_i32_0 = arith.constant 0 : i32
    return %arg0, %c0_i32 : i32, i32
  }
}

</mosaic_0001>

<llo_original>
// kernel: tpu_custom_call.1
$region0: #{tpu_custom_call.1}
  #allocation0 [shape = 'u32[]', space=smem, size = 0x4, offset = 0x4, fixed_abs, tag = 'smem constant byte address 0x4 - core index']
  #allocation1 [shape = 'u32[144,128]{1,0:T(1,128)}', space=vmem, size = 0x12000, scoped, tag = 'internal scratch']
  %s0 = inlined_call_operand.vmem [shape: bf16[256,32], index: 0, kind: input, shape index: {}]
  %s1 = inlined_call_operand.vmem [shape: bf16[256,256], index: 1, kind: input, shape index: {}]
  %s2 = inlined_call_operand.vmem [shape: f32[256,8], index: 2, kind: input, shape index: {}]
  %s3 = inlined_call_operand.vmem [shape: bf16[32,288], index: 3, kind: input, shape index: {}]
  %s4 = inlined_call_operand.vmem [shape: f32[1,32], index: 4, kind: input, shape index: {}]
  %s5 = inlined_call_operand.vmem [shape: f32[32,5], index: 5, kind: input, shape index: {}]
  %s6 = inlined_call_operand.vmem [shape: f32[1,5], index: 6, kind: input, shape index: {}]
  %s7 = inlined_call_operand.vmem [shape: f32[256,8], index: 7, kind: input, shape index: {}]
  %s8 = inlined_call_operand.vmem [shape: f32[256,14], index: 8, kind: output, shape index: {}]
  %s9 = sld [smem:[#allocation0]]
  $region65: #{tpu_custom_call.1} parent=0
    _
  %s11 = ssub.s32 1, %s9
  %s12 = scalar_select 0, %s11, %s9
  loop: start=0, step=1, limit=4
  $region2: #{tpu_custom_call.1} parent=0 // loop_pre_header
    _
  $region3: #{tpu_custom_call.1} parent=0 // loop_header
    %s14 = sphi 0, %s18
    %p15 = scmp.ge.s32.totalorder %s14, 4
    %s24 = sphi 0, %s26
    %s27 = sphi 0, %s24
    %s28 = sphi 0, %s27
    %s44 = sphi 0, %s28
    %s50 = sphi 0, %s52
    %s53 = sphi 0, %s50
    %s54 = sphi 0, %s53
    %s70 = sphi 0, %s54
    %s76 = sphi 0, %s78
    %s79 = sphi 0, %s76
    %s80 = sphi 0, %s79
    %s96 = sphi 0, %s80
    %s100 = sphi 0, %s100
    %s102 = sphi 0, %s100
    %s103 = sphi 0, %s102
    %s117 = sphi 0, %s103
    %s121 = sphi 0, %s121
    %s123 = sphi 0, %s121
    %s124 = sphi 0, %s123
    %s138 = sphi 0, %s124
    %s142 = sphi 0, %s142
    %s144 = sphi 0, %s142
    %s145 = sphi 0, %s144
    %s159 = sphi 0, %s145
    %s163 = sphi 0, %s163
    %s165 = sphi 0, %s163
    %s166 = sphi 0, %s165
    %s180 = sphi 0, %s166
    %s184 = sphi 0, %s184
    %s186 = sphi 0, %s184
    %s187 = sphi 0, %s186
    %s201 = sphi 0, %s187
    %s207 = sphi 0, %s209
    %s210 = sphi 0, %s207
    %s211 = sphi 0, %s210
    %s227 = sphi 0, %s211
  $region4: #{tpu_custom_call.1} parent=0 // loop_header_branch
    %17 = sbr.rel (%p15) target = $region8
  $region5: #{tpu_custom_call.1} parent=0 // loop_body
    %s19 = ssub.s32 %s14, 1
    %s20 = ssub.s32 %s14, 2
    %s21 = sadd.s32 %s14, 1
    %s22 = ssub.s32 %s14, %s21
    %p23 = scmp.eq.s32.totalorder %s22, 0
    %s25 = sadd.s32 %s24, 1
    %s26 = scalar_select %p23, %s24, %s25
    %p29 = pneg %p23
    %p30 = scmp.eq.s32.totalorder %s14, 1
    %p31 = por %p29, %p30
    %p32 = scmp.ne.s32.totalorder %s24, %s27
    %p33 = scmp.eq.s32.totalorder %s14, 0
    %p34 = por %p32, %p33
    %p35 = scmp.ne.s32.totalorder %s24, %s27
    %p36 = scmp.eq.s32.totalorder %s19, 1
    %p37 = por %p35, %p36
    %p38 = scmp.ne.s32.totalorder %s27, %s28
    %p39 = scmp.eq.s32.totalorder %s19, 0
    %p40 = por %p38, %p39
    %p41 = scmp.ne.s32.totalorder %s27, %s28
    %p42 = scmp.eq.s32.totalorder %s20, 1
    %p43 = por %p41, %p42
    %p45 = scmp.ne.s32.totalorder %s28, %s44
    %p46 = scmp.eq.s32.totalorder %s20, 0
    %p47 = por %p45, %p46
    %s48 = ssub.s32 %s14, %s21
    %p49 = scmp.eq.s32.totalorder %s48, 0
    %s51 = sadd.s32 %s50, 1
    %s52 = scalar_select %p49, %s50, %s51
    %p55 = pneg %p49
    %p56 = scmp.eq.s32.totalorder %s14, 1
    %p57 = por %p55, %p56
    %p58 = scmp.ne.s32.totalorder %s50, %s53
    %p59 = scmp.eq.s32.totalorder %s14, 0
    %p60 = por %p58, %p59
    %p61 = scmp.ne.s32.totalorder %s50, %s53
    %p62 = scmp.eq.s32.totalorder %s19, 1
    %p63 = por %p61, %p62
    %p64 = scmp.ne.s32.totalorder %s53, %s54
    %p65 = scmp.eq.s32.totalorder %s19, 0
    %p66 = por %p64, %p65
    %p67 = scmp.ne.s32.totalorder %s53, %s54
    %p68 = scmp.eq.s32.totalorder %s20, 1
    %p69 = por %p67, %p68
    %p71 = scmp.ne.s32.totalorder %s54, %s70
    %p72 = scmp.eq.s32.totalorder %s20, 0
    %p73 = por %p71, %p72
    %s74 = ssub.s32 %s14, %s21
    %p75 = scmp.eq.s32.totalorder %s74, 0
    %s77 = sadd.s32 %s76, 1
    %s78 = scalar_select %p75, %s76, %s77
    %p81 = pneg %p75
    %p82 = scmp.eq.s32.totalorder %s14, 1
    %p83 = por %p81, %p82
    %p84 = scmp.ne.s32.totalorder %s76, %s79
    %p85 = scmp.eq.s32.totalorder %s14, 0
    %p86 = por %p84, %p85
    %p87 = scmp.ne.s32.totalorder %s76, %s79
    %p88 = scmp.eq.s32.totalorder %s19, 1
    %p89 = por %p87, %p88
    %p90 = scmp.ne.s32.totalorder %s79, %s80
    %p91 = scmp.eq.s32.totalorder %s19, 0
    %p92 = por %p90, %p91
    %p93 = scmp.ne.s32.totalorder %s79, %s80
    %p94 = scmp.eq.s32.totalorder %s20, 1
    %p95 = por %p93, %p94
    %p97 = scmp.ne.s32.totalorder %s80, %s96
    %p98 = scmp.eq.s32.totalorder %s20, 0
    %p99 = por %p97, %p98
    %s101 = sadd.s32 %s100, 1
    %p104 = scmp.eq.s32.totalorder %s14, 1
    %p105 = scmp.ne.s32.totalorder %s100, %s102
    %p106 = scmp.eq.s32.totalorder %s14, 0
    %p107 = por %p105, %p106
    %p108 = scmp.ne.s32.totalorder %s100, %s102
    %p109 = scmp.eq.s32.totalorder %s19, 1
    %p110 = por %p108, %p109
    %p111 = scmp.ne.s32.totalorder %s102, %s103
    %p112 = scmp.eq.s32.totalorder %s19, 0
    %p113 = por %p111, %p112
    %p114 = scmp.ne.s32.totalorder %s102, %s103
    %p115 = scmp.eq.s32.totalorder %s20, 1
    %p116 = por %p114, %p115
    %p118 = scmp.ne.s32.totalorder %s103, %s117
    %p119 = scmp.eq.s32.totalorder %s20, 0
    %p120 = por %p118, %p119
    %s122 = sadd.s32 %s121, 1
    %p125 = scmp.eq.s32.totalorder %s14, 1
    %p126 = scmp.ne.s32.totalorder %s121, %s123
    %p127 = scmp.eq.s32.totalorder %s14, 0
    %p128 = por %p126, %p127
    %p129 = scmp.ne.s32.totalorder %s121, %s123
    %p130 = scmp.eq.s32.totalorder %s19, 1
    %p131 = por %p129, %p130
    %p132 = scmp.ne.s32.totalorder %s123, %s124
    %p133 = scmp.eq.s32.totalorder %s19, 0
    %p134 = por %p132, %p133
    %p135 = scmp.ne.s32.totalorder %s123, %s124
    %p136 = scmp.eq.s32.totalorder %s20, 1
    %p137 = por %p135, %p136
    %p139 = scmp.ne.s32.totalorder %s124, %s138
    %p140 = scmp.eq.s32.totalorder %s20, 0
    %p141 = por %p139, %p140
    %s143 = sadd.s32 %s142, 1
    %p146 = scmp.eq.s32.totalorder %s14, 1
    %p147 = scmp.ne.s32.totalorder %s142, %s144
    %p148 = scmp.eq.s32.totalorder %s14, 0
    %p149 = por %p147, %p148
    %p150 = scmp.ne.s32.totalorder %s142, %s144
    %p151 = scmp.eq.s32.totalorder %s19, 1
    %p152 = por %p150, %p151
    %p153 = scmp.ne.s32.totalorder %s144, %s145
    %p154 = scmp.eq.s32.totalorder %s19, 0
    %p155 = por %p153, %p154
    %p156 = scmp.ne.s32.totalorder %s144, %s145
    %p157 = scmp.eq.s32.totalorder %s20, 1
    %p158 = por %p156, %p157
    %p160 = scmp.ne.s32.totalorder %s145, %s159
    %p161 = scmp.eq.s32.totalorder %s20, 0
    %p162 = por %p160, %p161
    %s164 = sadd.s32 %s163, 1
    %p167 = scmp.eq.s32.totalorder %s14, 1
    %p168 = scmp.ne.s32.totalorder %s163, %s165
    %p169 = scmp.eq.s32.totalorder %s14, 0
    %p170 = por %p168, %p169
    %p171 = scmp.ne.s32.totalorder %s163, %s165
    %p172 = scmp.eq.s32.totalorder %s19, 1
    %p173 = por %p171, %p172
    %p174 = scmp.ne.s32.totalorder %s165, %s166
    %p175 = scmp.eq.s32.totalorder %s19, 0
    %p176 = por %p174, %p175
    %p177 = scmp.ne.s32.totalorder %s165, %s166
    %p178 = scmp.eq.s32.totalorder %s20, 1
    %p179 = por %p177, %p178
    %p181 = scmp.ne.s32.totalorder %s166, %s180
    %p182 = scmp.eq.s32.totalorder %s20, 0
    %p183 = por %p181, %p182
    %s185 = sadd.s32 %s184, 1
    %p188 = scmp.eq.s32.totalorder %s14, 1
    %p189 = scmp.ne.s32.totalorder %s184, %s186
    %p190 = scmp.eq.s32.totalorder %s14, 0
    %p191 = por %p189, %p190
    %p192 = scmp.ne.s32.totalorder %s184, %s186
    %p193 = scmp.eq.s32.totalorder %s19, 1
    %p194 = por %p192, %p193
    %p195 = scmp.ne.s32.totalorder %s186, %s187
    %p196 = scmp.eq.s32.totalorder %s19, 0
    %p197 = por %p195, %p196
    %p198 = scmp.ne.s32.totalorder %s186, %s187
    %p199 = scmp.eq.s32.totalorder %s20, 1
    %p200 = por %p198, %p199
    %p202 = scmp.ne.s32.totalorder %s187, %s201
    %p203 = scmp.eq.s32.totalorder %s20, 0
    %p204 = por %p202, %p203
    %s205 = ssub.s32 %s14, %s21
    %p206 = scmp.eq.s32.totalorder %s205, 0
    %s208 = sadd.s32 %s207, 1
    %s209 = scalar_select %p206, %s207, %s208
    %p212 = pneg %p206
    %p213 = scmp.eq.s32.totalorder %s14, 1
    %p214 = por %p212, %p213
    %p215 = scmp.ne.s32.totalorder %s207, %s210
    %p216 = scmp.eq.s32.totalorder %s14, 0
    %p217 = por %p215, %p216
    %p218 = scmp.ne.s32.totalorder %s207, %s210
    %p219 = scmp.eq.s32.totalorder %s19, 1
    %p220 = por %p218, %p219
    %p221 = scmp.ne.s32.totalorder %s210, %s211
    %p222 = scmp.eq.s32.totalorder %s19, 0
    %p223 = por %p221, %p222
    %p224 = scmp.ne.s32.totalorder %s210, %s211
    %p225 = scmp.eq.s32.totalorder %s20, 1
    %p226 = por %p224, %p225
    %p228 = scmp.ne.s32.totalorder %s211, %s227
    %p229 = scmp.eq.s32.totalorder %s20, 0
    %p230 = por %p228, %p229
    %p231 = scmp.le.s32.totalorder 1, %s14
    %p232 = scmp.lt.s32.totalorder %s14, 3
    %p233 = pnand %p231, %p232
    %p234 = pneg %p233
    // Predicated region
    $region9: #{tpu_custom_call.1} parent=5 // pred_check
      _
    $region10: #{tpu_custom_call.1} parent=5 // pred_check_branch
      %236 = sbr.rel (%p233) target = $region12
    $region11: #{tpu_custom_call.1} parent=5 // pred_region
      %s237 = ssub.s32 %s14, 1
      // Predicated region
      $region13: #{tpu_custom_call.1} parent=11 // pred_check
        %p238 = pneg %p113
      $region14: #{tpu_custom_call.1} parent=11 // pred_check_branch
        %240 = sbr.rel (%p238) target = $region16
      $region15: #{tpu_custom_call.1} parent=11 // pred_region
        _
      $region16: #{tpu_custom_call.1} parent=11 // pred_fallthru
        _
      // Predicated region
      $region17: #{tpu_custom_call.1} parent=11 // pred_check
        %p241 = pneg %p134
      $region18: #{tpu_custom_call.1} parent=11 // pred_check_branch
        %243 = sbr.rel (%p241) target = $region20
      $region19: #{tpu_custom_call.1} parent=11 // pred_region
        _
      $region20: #{tpu_custom_call.1} parent=11 // pred_fallthru
        _
      // Predicated region
      $region21: #{tpu_custom_call.1} parent=11 // pred_check
        %p244 = pneg %p155
      $region22: #{tpu_custom_call.1} parent=11 // pred_check_branch
        %246 = sbr.rel (%p244) target = $region24
      $region23: #{tpu_custom_call.1} parent=11 // pred_region
        _
      $region24: #{tpu_custom_call.1} parent=11 // pred_fallthru
        _
      // Predicated region
      $region25: #{tpu_custom_call.1} parent=11 // pred_check
        %p247 = pneg %p176
      $region26: #{tpu_custom_call.1} parent=11 // pred_check_branch
        %249 = sbr.rel (%p247) target = $region28
      $region27: #{tpu_custom_call.1} parent=11 // pred_region
        _
      $region28: #{tpu_custom_call.1} parent=11 // pred_fallthru
        _
      // Predicated region
      $region29: #{tpu_custom_call.1} parent=11 // pred_check
        %p250 = pneg %p197
      $region30: #{tpu_custom_call.1} parent=11 // pred_check_branch
        %252 = sbr.rel (%p250) target = $region32
      $region31: #{tpu_custom_call.1} parent=11 // pred_region
        _
      $region32: #{tpu_custom_call.1} parent=11 // pred_fallthru
        _
    $region12: #{tpu_custom_call.1} parent=5 // pred_fallthru
      _
    %p253 = scmp.lt.s32.totalorder %s14, 2
    // Predicated region
    $region33: #{tpu_custom_call.1} parent=5 // pred_check
      %p254 = pneg %p253
    $region34: #{tpu_custom_call.1} parent=5 // pred_check_branch
      %256 = sbr.rel (%p254) target = $region36
    $region35: #{tpu_custom_call.1} parent=5 // pred_region
      // Predicated region
      $region37: #{tpu_custom_call.1} parent=35 // pred_check
        %p257 = pneg %p34
      $region38: #{tpu_custom_call.1} parent=35 // pred_check_branch
        %259 = sbr.rel (%p257) target = $region40
      $region39: #{tpu_custom_call.1} parent=35 // pred_region
        %s260 = smul.u32 16, %s14
        %p261 = scmp.lt.s32.totalorder %s260, 31
        %s262 = scalar_select %p261, %s260, 31
        %s263 = smul.addr %s262, 4
        %s264 = scalar_lea.vmem %s0, %s263
        %s265 = smul.u32 16, %s14
      $region40: #{tpu_custom_call.1} parent=35 // pred_fallthru
        _
      // Predicated region
      $region41: #{tpu_custom_call.1} parent=35 // pred_check
        %p266 = pneg %p60
      $region42: #{tpu_custom_call.1} parent=35 // pred_check_branch
        %268 = sbr.rel (%p266) target = $region44
      $region43: #{tpu_custom_call.1} parent=35 // pred_region
        %s269 = smul.u32 16, %s14
        %p270 = scmp.lt.s32.totalorder %s269, 31
        %s271 = scalar_select %p270, %s269, 31
        %s272 = smul.addr %s271, 2
        %s273 = smul.addr %s272, 4
        %s274 = scalar_lea.vmem %s1, %s273
        %s275 = smul.u32 16, %s14
      $region44: #{tpu_custom_call.1} parent=35 // pred_fallthru
        _
      // Predicated region
      $region45: #{tpu_custom_call.1} parent=35 // pred_check
        %p276 = pneg %p86
      $region46: #{tpu_custom_call.1} parent=35 // pred_check_branch
        %278 = sbr.rel (%p276) target = $region48
      $region47: #{tpu_custom_call.1} parent=35 // pred_region
        %s279 = smul.u32 16, %s14
        %p280 = scmp.lt.s32.totalorder %s279, 31
        %s281 = scalar_select %p280, %s279, 31
        %s282 = smul.addr %s281, 8
        %s283 = scalar_lea.vmem %s2, %s282
        %s284 = smul.u32 16, %s14
      $region48: #{tpu_custom_call.1} parent=35 // pred_fallthru
        _
    $region36: #{tpu_custom_call.1} parent=5 // pred_fallthru
      _
    %p285 = scmp.le.s32.totalorder 1, %s14
    %p286 = scmp.lt.s32.totalorder %s14, 3
    %p287 = pnand %p285, %p286
    %p288 = pneg %p287
    // Predicated region
    $region49: #{tpu_custom_call.1} parent=5 // pred_check
      _
    $region50: #{tpu_custom_call.1} parent=5 // pred_check_branch
      %290 = sbr.rel (%p287) target = $region52
    $region51: #{tpu_custom_call.1} parent=5 // pred_region
      %s291 = ssub.s32 %s14, 1
      %s292 = smul.u32 16, %s19
      %p293 = scmp.lt.s32.totalorder %s292, 31
      %s294 = scalar_select %p293, %s292, 31
      %s295 = smul.addr %s294, 4
      %s296 = scalar_lea.vmem %s0, %s295
      %p297 = pneg %p40
      %p298 = pneg %p37
      %s299 = smul.u32 16, %s19
      %p300 = scmp.lt.s32.totalorder %s299, 31
      %s301 = scalar_select %p300, %s299, 31
      %s302 = smul.addr %s301, 2
      %s303 = smul.addr %s302, 4
      %s304 = scalar_lea.vmem %s1, %s303
      %p305 = pneg %p66
      %p306 = pneg %p63
      %s307 = smul.u32 16, %s19
      %p308 = scmp.lt.s32.totalorder %s307, 31
      %s309 = scalar_select %p308, %s307, 31
      %s310 = smul.addr %s309, 8
      %s311 = scalar_lea.vmem %s2, %s310
      %p312 = pneg %p92
      %p313 = pneg %p89
      %p314 = pneg %p113
      %p315 = pneg %p110
      %p316 = pneg %p134
      %p317 = pneg %p131
      %p318 = pneg %p155
      %p319 = pneg %p152
      %p320 = pneg %p176
      %p321 = pneg %p173
      %p322 = pneg %p197
      %p323 = pneg %p194
      %p324 = pneg %p223
      %p325 = pneg %p220
      %s326 = smul.u32 16, %s19
      %p327 = scmp.lt.s32.totalorder %s326, 31
      %s328 = scalar_select %p327, %s326, 31
      %s329 = smul.addr %s328, 8
      %s330 = scalar_lea.vmem %s8, %s329
      %s331 = smul.u32 16, %s19
      %p332 = scmp.lt.s32.totalorder %s331, 31
      %s333 = scalar_select %p332, %s331, 31
      %s334 = smul.addr %s333, 4
      %s335 = scalar_lea.vmem %s0, %s334
      %s336 = smul.u32 16, %s19
      %s337 = smul.u32 16, %s19
      %p338 = scmp.lt.s32.totalorder %s337, 31
      %s339 = scalar_select %p338, %s337, 31
      %s340 = smul.addr %s339, 2
      %s341 = smul.addr %s340, 4
      %s342 = scalar_lea.vmem %s1, %s341
      %s343 = smul.u32 16, %s19
      %s344 = smul.u32 16, %s19
      %p345 = scmp.lt.s32.totalorder %s344, 31
      %s346 = scalar_select %p345, %s344, 31
      %s347 = smul.addr %s346, 8
      %s348 = scalar_lea.vmem %s2, %s347
      %s349 = smul.u32 16, %s19
      %s350 = smul.u32 16, %s19
      %p351 = scmp.lt.s32.totalorder %s350, 31
      %s352 = scalar_select %p351, %s350, 31
      %s353 = smul.addr %s352, 8
      %s354 = scalar_lea.vmem %s8, %s353
      %s355 = smul.u32 16, %s19
      %v357 = vld [vmem:[%s335] sm:$0xf]
      %v358 = vld [vmem:[%s335 + $0x4] sm:$0xf]
      %v359 = vld [vmem:[%s335 + $0x8] sm:$0xf]
      %v360 = vld [vmem:[%s335 + $0xc] sm:$0xf]
      %v361 = vld [vmem:[%s335 + $0x10] sm:$0xf]
      %v362 = vld [vmem:[%s335 + $0x14] sm:$0xf]
      %v363 = vld [vmem:[%s335 + $0x18] sm:$0xf]
      %v364 = vld [vmem:[%s335 + $0x1c] sm:$0xf]
      %v365 = vld [vmem:[%s335 + $0x20] sm:$0xf]
      %v366 = vld [vmem:[%s335 + $0x24] sm:$0xf]
      %v367 = vld [vmem:[%s335 + $0x28] sm:$0xf]
      %v368 = vld [vmem:[%s335 + $0x2c] sm:$0xf]
      %v369 = vld [vmem:[%s335 + $0x30] sm:$0xf]
      %v370 = vld [vmem:[%s335 + $0x34] sm:$0xf]
      %v371 = vld [vmem:[%s335 + $0x38] sm:$0xf]
      %v372 = vld [vmem:[%s335 + $0x3c] sm:$0xf]
      %v373 = vld [vmem:[%s3] sm:$0xff]
      %v374 = vld [vmem:[%s3 + $0x8] sm:$0xf]
      %v375 = vld [vmem:[%s3 + $0xc] sm:$0xff]
      %v376 = vld [vmem:[%s3 + $0x14] sm:$0xf]
      %v377 = vld [vmem:[%s3 + $0x18] sm:$0xff]
      %v378 = vld [vmem:[%s3 + $0x20] sm:$0xf]
      %v379 = vld [vmem:[%s3 + $0x24] sm:$0xff]
      %v380 = vld [vmem:[%s3 + $0x2c] sm:$0xf]
      %v397 = vunpack.c.l.b16 %v357
      %v398 = vunpack.c.l.b16 %v358
      %v399 = vunpack.c.l.b16 %v359
      %v400 = vunpack.c.l.b16 %v360
      %v401 = vunpack.c.l.b16 %v361
      %v402 = vunpack.c.l.b16 %v362
      %v403 = vunpack.c.l.b16 %v363
      %v404 = vunpack.c.l.b16 %v364
      %v405 = vunpack.c.l.b16 %v365
      %v406 = vunpack.c.l.b16 %v366
      %v407 = vunpack.c.l.b16 %v367
      %v408 = vunpack.c.l.b16 %v368
      %v409 = vunpack.c.l.b16 %v369
      %v410 = vunpack.c.l.b16 %v370
      %v411 = vunpack.c.l.b16 %v371
      %v412 = vunpack.c.l.b16 %v372
      %v413 = vpack.c.b16 %v398, %v397
      %v414 = vpack.c.b16 %v400, %v399
      %v415 = vpack.c.b16 %v402, %v401
      %v416 = vpack.c.b16 %v404, %v403
      %v417 = vpack.c.b16 %v406, %v405
      %v418 = vpack.c.b16 %v408, %v407
      %v419 = vpack.c.b16 %v410, %v409
      %v420 = vpack.c.b16 %v412, %v411
      %v429 = vunpack.c.l.b16 %v373
      %v430 = vunpack.c.h.b16 %v373
      %v431 = vunpack.c.l.b16 %v374
      %v432 = vunpack.c.l.b16 %v375
      %v433 = vunpack.c.h.b16 %v375
      %v434 = vunpack.c.l.b16 %v376
      %v435 = vunpack.c.l.b16 %v377
      %v436 = vunpack.c.h.b16 %v377
      %v437 = vunpack.c.l.b16 %v378
      %v438 = vunpack.c.l.b16 %v379
      %v439 = vunpack.c.h.b16 %v379
      %v440 = vunpack.c.l.b16 %v380
      %v441 = vpack.c.b16 %v432, %v429
      %v442 = vpack.c.b16 %v433, %v430
      %v443 = vpack.c.b16 %v434, %v431
      %v444 = vpack.c.b16 %v438, %v435
      %v445 = vpack.c.b16 %v439, %v436
      %v446 = vpack.c.b16 %v440, %v437
      %vm453 = vcmask 261120
      %v455 = vsel %vm453, %v413, 0
      %v458 = vsel %vm453, %v414, 0
      %v461 = vsel %vm453, %v415, 0
      %v464 = vsel %vm453, %v416, 0
      %v467 = vsel %vm453, %v417, 0
      %v470 = vsel %vm453, %v418, 0
      %v473 = vsel %vm453, %v419, 0
      %v476 = vsel %vm453, %v420, 0
      %478 = vmatprep.subr.bf16.mxu0 %v442
      %479 = vmatpush1.bf16.msra.mxu0 %v441
      %480 = vmatprep.subr.bf16.mxu0 %v445
      %481 = vmatpush1.bf16.msra.mxu0 %v444
      %482 = vmatprep.subr.bf16.mxu0 0
      %483 = vmatpush1.bf16.msra.mxu0 0
      %484 = vmatprep.subr.bf16.mxu0 0
      %485 = vmatpush1.bf16.msra.mxu0 0
      %486 = vmatprep.subr.bf16.mxu0 0
      %487 = vmatpush1.bf16.msra.mxu0 0
      %488 = vmatprep.subr.bf16.mxu0 0
      %489 = vmatpush1.bf16.msra.mxu0 0
      %490 = vmatprep.subr.bf16.mxu0 0
      %491 = vmatpush1.bf16.msra.mxu0 0
      %492 = vmatprep.subr.bf16.mxu0 0
      %493 = vmatpush1.bf16.msra.mxu0 0
      %494 = vmatprep.subr.bf16.mxu0 0
      %495 = vmatpush1.bf16.msra.mxu0 0
      %496 = vmatprep.subr.bf16.mxu0 0
      %497 = vmatpush1.bf16.msra.mxu0 0
      %498 = vmatprep.subr.bf16.mxu0 0
      %499 = vmatpush1.bf16.msra.mxu0 0
      %500 = vmatprep.subr.bf16.mxu0 0
      %501 = vmatpush1.bf16.msra.mxu0 0
      %502 = vmatprep.subr.bf16.mxu0 0
      %503 = vmatpush1.bf16.msra.mxu0 0
      %504 = vmatprep.subr.bf16.mxu0 0
      %505 = vmatpush1.bf16.msra.mxu0 0
      %506 = vmatprep.subr.bf16.mxu0 0
      %507 = vmatpush1.bf16.msra.mxu0 0
      %508 = vmatprep.subr.bf16.mxu0 0
      %509 = vmatpush1.bf16.msra.mxu0 0
      %510 = vmatprep.mubr.bf16.mxu0 0
      %511 = vmatmul.mubr.bf16.gmra.mrb[0].mxu0 %v455
      %v512 = vpop.f32.mrb[0].mxu0
      %v513 = vadd.f32 0.0, %v512
      %v514 = vpop.f32.mrb[0].mxu0
      %v515 = vadd.f32 0.0, %v514
      %v516 = vpop.f32.mrb[0].mxu0
      %v517 = vadd.f32 0.0, %v516
      %v518 = vpop.f32.mrb[0].mxu0
      %v519 = vadd.f32 0.0, %v518
      %520 = vmatprep.mubr.bf16.mxu0 0
      %521 = vmatmul.mubr.bf16.gmra.mrb[0].mxu0 %v458
      %v522 = vpop.f32.mrb[0].mxu0
      %v523 = vadd.f32 0.0, %v522
      %v524 = vpop.f32.mrb[0].mxu0
      %v525 = vadd.f32 0.0, %v524
      %v526 = vpop.f32.mrb[0].mxu0
      %v527 = vadd.f32 0.0, %v526
      %v528 = vpop.f32.mrb[0].mxu0
      %v529 = vadd.f32 0.0, %v528
      %530 = vmatprep.mubr.bf16.mxu0 0
      %531 = vmatmul.mubr.bf16.gmra.mrb[0].mxu0 %v461
      %v532 = vpop.f32.mrb[0].mxu0
      %v533 = vadd.f32 0.0, %v532
      %v534 = vpop.f32.mrb[0].mxu0
      %v535 = vadd.f32 0.0, %v534
      %v536 = vpop.f32.mrb[0].mxu0
      %v537 = vadd.f32 0.0, %v536
      %v538 = vpop.f32.mrb[0].mxu0
      %v539 = vadd.f32 0.0, %v538
      %540 = vmatprep.mubr.bf16.mxu0 0
      %541 = vmatmul.mubr.bf16.gmra.mrb[0].mxu0 %v464
      %v542 = vpop.f32.mrb[0].mxu0
      %v543 = vadd.f32 0.0, %v542
      %v544 = vpop.f32.mrb[0].mxu0
      %v545 = vadd.f32 0.0, %v544
      %v546 = vpop.f32.mrb[0].mxu0
      %v547 = vadd.f32 0.0, %v546
      %v548 = vpop.f32.mrb[0].mxu0
      %v549 = vadd.f32 0.0, %v548
      %550 = vmatprep.mubr.bf16.mxu0 0
      %551 = vmatmul.mubr.bf16.gmra.mrb[0].mxu0 %v467
      %v552 = vpop.f32.mrb[0].mxu0
      %v553 = vadd.f32 0.0, %v552
      %v554 = vpop.f32.mrb[0].mxu0
      %v555 = vadd.f32 0.0, %v554
      %v556 = vpop.f32.mrb[0].mxu0
      %v557 = vadd.f32 0.0, %v556
      %v558 = vpop.f32.mrb[0].mxu0
      %v559 = vadd.f32 0.0, %v558
      %560 = vmatprep.mubr.bf16.mxu0 0
      %561 = vmatmul.mubr.bf16.gmra.mrb[0].mxu0 %v470
      %v562 = vpop.f32.mrb[0].mxu0
      %v563 = vadd.f32 0.0, %v562
      %v564 = vpop.f32.mrb[0].mxu0
      %v565 = vadd.f32 0.0, %v564
      %v566 = vpop.f32.mrb[0].mxu0
      %v567 = vadd.f32 0.0, %v566
      %v568 = vpop.f32.mrb[0].mxu0
      %v569 = vadd.f32 0.0, %v568
      %570 = vmatprep.mubr.bf16.mxu0 0
      %571 = vmatmul.mubr.bf16.gmra.mrb[0].mxu0 %v473
      %v572 = vpop.f32.mrb[0].mxu0
      %v573 = vadd.f32 0.0, %v572
      %v574 = vpop.f32.mrb[0].mxu0
      %v575 = vadd.f32 0.0, %v574
      %v576 = vpop.f32.mrb[0].mxu0
      %v577 = vadd.f32 0.0, %v576
      %v578 = vpop.f32.mrb[0].mxu0
      %v579 = vadd.f32 0.0, %v578
      %580 = vmatprep.mubr.bf16.mxu0 0
      %581 = vmatmul.mubr.bf16.gmra.mrb[0].mxu0 %v476
      %v582 = vpop.f32.mrb[0].mxu0
      %v583 = vadd.f32 0.0, %v582
      %v584 = vpop.f32.mrb[0].mxu0
      %v585 = vadd.f32 0.0, %v584
      %v586 = vpop.f32.mrb[0].mxu0
      %v587 = vadd.f32 0.0, %v586
      %v588 = vpop.f32.mrb[0].mxu0
      %v589 = vadd.f32 0.0, %v588
      %590 = vdwg.mxu0
      %591 = vmatprep.subr.bf16.mxu0 0
      %592 = vmatpush1.bf16.msra.mxu0 %v443
      %593 = vmatprep.subr.bf16.mxu0 0
      %594 = vmatpush1.bf16.msra.mxu0 %v446
      %595 = vmatprep.subr.bf16.mxu0 0
      %596 = vmatpush1.bf16.msra.mxu0 0
      %597 = vmatprep.subr.bf16.mxu0 0
      %598 = vmatpush1.bf16.msra.mxu0 0
      %599 = vmatprep.subr.bf16.mxu0 0
      %600 = vmatpush1.bf16.msra.mxu0 0
      %601 = vmatprep.subr.bf16.mxu0 0
      %602 = vmatpush1.bf16.msra.mxu0 0
      %603 = vmatprep.subr.bf16.mxu0 0
      %604 = vmatpush1.bf16.msra.mxu0 0
      %605 = vmatprep.subr.bf16.mxu0 0
      %606 = vmatpush1.bf16.msra.mxu0 0
      %607 = vmatprep.subr.bf16.mxu0 0
      %608 = vmatpush1.bf16.msra.mxu0 0
      %609 = vmatprep.subr.bf16.mxu0 0
      %610 = vmatpush1.bf16.msra.mxu0 0
      %611 = vmatprep.subr.bf16.mxu0 0
      %612 = vmatpush1.bf16.msra.mxu0 0
      %613 = vmatprep.subr.bf16.mxu0 0
      %614 = vmatpush1.bf16.msra.mxu0 0
      %615 = vmatprep.subr.bf16.mxu0 0
      %616 = vmatpush1.bf16.msra.mxu0 0
      %617 = vmatprep.subr.bf16.mxu0 0
      %618 = vmatpush1.bf16.msra.mxu0 0
      %619 = vmatprep.subr.bf16.mxu0 0
      %620 = vmatpush1.bf16.msra.mxu0 0
      %621 = vmatprep.subr.bf16.mxu0 0
      %622 = vmatpush1.bf16.msra.mxu0 0
      %623 = vmatprep.mubr.bf16.mxu0 0
      %624 = vmatmul.mubr.bf16.gmra.mrb[0].mxu0 %v455
      %v625 = vpop.f32.mrb[0].mxu0
      %v626 = vadd.f32 0.0, %v625
      %v627 = vpop.f32.mrb[0].mxu0
      %v628 = vpop.f32.mrb[0].mxu0
      %v629 = vadd.f32 0.0, %v628
      %v630 = vpop.f32.mrb[0].mxu0
      %631 = vmatprep.mubr.bf16.mxu0 0
      %632 = vmatmul.mubr.bf16.gmra.mrb[0].mxu0 %v458
      %v633 = vpop.f32.mrb[0].mxu0
      %v634 = vadd.f32 0.0, %v633
      %v635 = vpop.f32.mrb[0].mxu0
      %v636 = vpop.f32.mrb[0].mxu0
      %v637 = vadd.f32 0.0, %v636
      %v638 = vpop.f32.mrb[0].mxu0
      %639 = vmatprep.mubr.bf16.mxu0 0
      %640 = vmatmul.mubr.bf16.gmra.mrb[0].mxu0 %v461
      %v641 = vpop.f32.mrb[0].mxu0
      %v642 = vadd.f32 0.0, %v641
      %v643 = vpop.f32.mrb[0].mxu0
      %v644 = vpop.f32.mrb[0].mxu0
      %v645 = vadd.f32 0.0, %v644
      %v646 = vpop.f32.mrb[0].mxu0
      %647 = vmatprep.mubr.bf16.mxu0 0
      %648 = vmatmul.mubr.bf16.gmra.mrb[0].mxu0 %v464
      %v649 = vpop.f32.mrb[0].mxu0
      %v650 = vadd.f32 0.0, %v649
      %v651 = vpop.f32.mrb[0].mxu0
      %v652 = vpop.f32.mrb[0].mxu0
      %v653 = vadd.f32 0.0, %v652
      %v654 = vpop.f32.mrb[0].mxu0
      %655 = vmatprep.mubr.bf16.mxu0 0
      %656 = vmatmul.mubr.bf16.gmra.mrb[0].mxu0 %v467
      %v657 = vpop.f32.mrb[0].mxu0
      %v658 = vadd.f32 0.0, %v657
      %v659 = vpop.f32.mrb[0].mxu0
      %v660 = vpop.f32.mrb[0].mxu0
      %v661 = vadd.f32 0.0, %v660
      %v662 = vpop.f32.mrb[0].mxu0
      %663 = vmatprep.mubr.bf16.mxu0 0
      %664 = vmatmul.mubr.bf16.gmra.mrb[0].mxu0 %v470
      %v665 = vpop.f32.mrb[0].mxu0
      %v666 = vadd.f32 0.0, %v665
      %v667 = vpop.f32.mrb[0].mxu0
      %v668 = vpop.f32.mrb[0].mxu0
      %v669 = vadd.f32 0.0, %v668
      %v670 = vpop.f32.mrb[0].mxu0
      %671 = vmatprep.mubr.bf16.mxu0 0
      %672 = vmatmul.mubr.bf16.gmra.mrb[0].mxu0 %v473
      %v673 = vpop.f32.mrb[0].mxu0
      %v674 = vadd.f32 0.0, %v673
      %v675 = vpop.f32.mrb[0].mxu0
      %v676 = vpop.f32.mrb[0].mxu0
      %v677 = vadd.f32 0.0, %v676
      %v678 = vpop.f32.mrb[0].mxu0
      %679 = vmatprep.mubr.bf16.mxu0 0
      %680 = vmatmul.mubr.bf16.gmra.mrb[0].mxu0 %v476
      %v681 = vpop.f32.mrb[0].mxu0
      %v682 = vadd.f32 0.0, %v681
      %v683 = vpop.f32.mrb[0].mxu0
      %v684 = vpop.f32.mrb[0].mxu0
      %v685 = vadd.f32 0.0, %v684
      %v686 = vpop.f32.mrb[0].mxu0
      %687 = vdwg.mxu0
      %v688 = vld [vmem:[%s4] sm:$0x1]
      %v690 = vlaneseq
      %v691 = vshrl.u32 %v690, 7
      %v692 = vsub.s32 0, %v691
      %v693 = vrot.slane %v688, %v692
      %v695 = vadd.f32 %v626, %v693
      %v696 = vadd.f32 %v629, %v693
      %v697 = vadd.f32 %v634, %v693
      %v698 = vadd.f32 %v637, %v693
      %v699 = vadd.f32 %v642, %v693
      %v700 = vadd.f32 %v645, %v693
      %v701 = vadd.f32 %v650, %v693
      %v702 = vadd.f32 %v653, %v693
      %v703 = vadd.f32 %v658, %v693
      %v704 = vadd.f32 %v661, %v693
      %v705 = vadd.f32 %v666, %v693
      %v706 = vadd.f32 %v669, %v693
      %v707 = vadd.f32 %v674, %v693
      %v708 = vadd.f32 %v677, %v693
      %v709 = vadd.f32 %v682, %v693
      %v710 = vadd.f32 %v685, %v693
      %v711 = vmax.f32 %v695, 0.0
      %v712 = vmax.f32 %v696, 0.0
      %v713 = vmax.f32 %v697, 0.0
      %v714 = vmax.f32 %v698, 0.0
      %v715 = vmax.f32 %v699, 0.0
      %v716 = vmax.f32 %v700, 0.0
      %v717 = vmax.f32 %v701, 0.0
      %v718 = vmax.f32 %v702, 0.0
      %v719 = vmax.f32 %v703, 0.0
      %v720 = vmax.f32 %v704, 0.0
      %v721 = vmax.f32 %v705, 0.0
      %v722 = vmax.f32 %v706, 0.0
      %v723 = vmax.f32 %v707, 0.0
      %v724 = vmax.f32 %v708, 0.0
      %v725 = vmax.f32 %v709, 0.0
      %v726 = vmax.f32 %v710, 0.0
      %v727 = vld [vmem:[%s5] sm:$0xff]
      %v728 = vld [vmem:[%s5 + $0x8] sm:$0xff]
      %v729 = vld [vmem:[%s5 + $0x10] sm:$0xff]
      %v730 = vld [vmem:[%s5 + $0x18] sm:$0xff]
      %v731 = vld [vmem:[%s6] sm:$0x1]
      %v733 = vlaneseq
      %v734 = vshrl.u32 %v733, 7
      %v735 = vsub.s32 0, %v734
      %v736 = vrot.slane %v731, %v735
      %v739 = vsel %vm453, %v711, 0
      %v742 = vsel %vm453, %v712, 0
      %v745 = vsel %vm453, %v713, 0
      %v748 = vsel %vm453, %v714, 0
      %v751 = vsel %vm453, %v715, 0
      %v754 = vsel %vm453, %v716, 0
      %v757 = vsel %vm453, %v717, 0
      %v760 = vsel %vm453, %v718, 0
      %v763 = vsel %vm453, %v719, 0
      %v766 = vsel %vm453, %v720, 0
      %v769 = vsel %vm453, %v721, 0
      %v772 = vsel %vm453, %v722, 0
      %v775 = vsel %vm453, %v723, 0
      %v778 = vsel %vm453, %v724, 0
      %v781 = vsel %vm453, %v725, 0
      %v784 = vsel %vm453, %v726, 0
      %786 = vmatprep.subr.mxu0 0.0
      %787 = vmatpush1.msra.mxu0 %v727
      %788 = vmatprep.subr.mxu0 0.0
      %789 = vmatpush1.msra.mxu0 %v728
      %790 = vmatprep.subr.mxu0 0.0
      %791 = vmatpush1.msra.mxu0 %v729
      %792 = vmatprep.subr.mxu0 0.0
      %793 = vmatpush1.msra.mxu0 %v730
      %794 = vmatprep.subr.mxu0 0.0
      %795 = vmatpush1.msra.mxu0 0.0
      %796 = vmatprep.subr.mxu0 0.0
      %797 = vmatpush1.msra.mxu0 0.0
      %798 = vmatprep.subr.mxu0 0.0
      %799 = vmatpush1.msra.mxu0 0.0
      %800 = vmatprep.subr.mxu0 0.0
      %801 = vmatpush1.msra.mxu0 0.0
      %802 = vmatprep.subr.mxu0 0.0
      %803 = vmatpush1.msra.mxu0 0.0
      %804 = vmatprep.subr.mxu0 0.0
      %805 = vmatpush1.msra.mxu0 0.0
      %806 = vmatprep.subr.mxu0 0.0
      %807 = vmatpush1.msra.mxu0 0.0
      %808 = vmatprep.subr.mxu0 0.0
      %809 = vmatpush1.msra.mxu0 0.0
      %810 = vmatprep.subr.mxu0 0.0
      %811 = vmatpush1.msra.mxu0 0.0
      %812 = vmatprep.subr.mxu0 0.0
      %813 = vmatpush1.msra.mxu0 0.0
      %814 = vmatprep.subr.mxu0 0.0
      %815 = vmatpush1.msra.mxu0 0.0
      %816 = vmatprep.subr.mxu0 0.0
      %817 = vmatpush1.msra.mxu0 0.0
      %818 = vmatprep.subr.mxu0 0.0
      %819 = vmatpush1.msra.mxu0 0.0
      %820 = vmatprep.subr.mxu0 0.0
      %821 = vmatpush1.msra.mxu0 0.0
      %822 = vmatprep.subr.mxu0 0.0
      %823 = vmatpush1.msra.mxu0 0.0
      %824 = vmatprep.subr.mxu0 0.0
      %825 = vmatpush1.msra.mxu0 0.0
      %826 = vmatprep.subr.mxu0 0.0
      %827 = vmatpush1.msra.mxu0 0.0
      %828 = vmatprep.subr.mxu0 0.0
      %829 = vmatpush1.msra.mxu0 0.0
      %830 = vmatprep.subr.mxu0 0.0
      %831 = vmatpush1.msra.mxu0 0.0
      %832 = vmatprep.subr.mxu0 0.0
      %833 = vmatpush1.msra.mxu0 0.0
      %834 = vmatprep.subr.mxu0 0.0
      %835 = vmatpush1.msra.mxu0 0.0
      %836 = vmatprep.subr.mxu0 0.0
      %837 = vmatpush1.msra.mxu0 0.0
      %838 = vmatprep.subr.mxu0 0.0
      %839 = vmatpush1.msra.mxu0 0.0
      %840 = vmatprep.subr.mxu0 0.0
      %841 = vmatpush1.msra.mxu0 0.0
      %842 = vmatprep.subr.mxu0 0.0
      %843 = vmatpush1.msra.mxu0 0.0
      %844 = vmatprep.subr.mxu0 0.0
      %845 = vmatpush1.msra.mxu0 0.0
      %846 = vmatprep.subr.mxu0 0.0
      %847 = vmatpush1.msra.mxu0 0.0
      %848 = vmatprep.subr.mxu0 0.0
      %849 = vmatpush1.msra.mxu0 0.0
      %850 = vmatprep.mubr.f32.mxu0 0.0
      %851 = vmatmul.mubr.f32.gmra.mrb[0].mxu0 %v739
      %v852 = vpop.f32.mrb[0].mxu0
      %v853 = vadd.f32 %v736, %v852
      %v854 = vpop.f32.mrb[0].mxu0
      %855 = vmatprep.mubr.f32.mxu0 0.0
      %856 = vmatmul.mubr.f32.gmra.mrb[0].mxu0 %v742
      %v857 = vpop.f32.mrb[0].mxu0
      %v858 = vadd.f32 %v736, %v857
      %v859 = vpop.f32.mrb[0].mxu0
      %860 = vmatprep.mubr.f32.mxu0 0.0
      %861 = vmatmul.mubr.f32.gmra.mrb[0].mxu0 %v745
      %v862 = vpop.f32.mrb[0].mxu0
      %v863 = vadd.f32 %v736, %v862
      %v864 = vpop.f32.mrb[0].mxu0
      %865 = vmatprep.mubr.f32.mxu0 0.0
      %866 = vmatmul.mubr.f32.gmra.mrb[0].mxu0 %v748
      %v867 = vpop.f32.mrb[0].mxu0
      %v868 = vadd.f32 %v736, %v867
      %v869 = vpop.f32.mrb[0].mxu0
      %870 = vmatprep.mubr.f32.mxu0 0.0
      %871 = vmatmul.mubr.f32.gmra.mrb[0].mxu0 %v751
      %v872 = vpop.f32.mrb[0].mxu0
      %v873 = vadd.f32 %v736, %v872
      %v874 = vpop.f32.mrb[0].mxu0
      %875 = vmatprep.mubr.f32.mxu0 0.0
      %876 = vmatmul.mubr.f32.gmra.mrb[0].mxu0 %v754
      %v877 = vpop.f32.mrb[0].mxu0
      %v878 = vadd.f32 %v736, %v877
      %v879 = vpop.f32.mrb[0].mxu0
      %880 = vmatprep.mubr.f32.mxu0 0.0
      %881 = vmatmul.mubr.f32.gmra.mrb[0].mxu0 %v757
      %v882 = vpop.f32.mrb[0].mxu0
      %v883 = vadd.f32 %v736, %v882
      %v884 = vpop.f32.mrb[0].mxu0
      %885 = vmatprep.mubr.f32.mxu0 0.0
      %886 = vmatmul.mubr.f32.gmra.mrb[0].mxu0 %v760
      %v887 = vpop.f32.mrb[0].mxu0
      %v888 = vadd.f32 %v736, %v887
      %v889 = vpop.f32.mrb[0].mxu0
      %890 = vmatprep.mubr.f32.mxu0 0.0
      %891 = vmatmul.mubr.f32.gmra.mrb[0].mxu0 %v763
      %v892 = vpop.f32.mrb[0].mxu0
      %v893 = vadd.f32 %v736, %v892
      %v894 = vpop.f32.mrb[0].mxu0
      %895 = vmatprep.mubr.f32.mxu0 0.0
      %896 = vmatmul.mubr.f32.gmra.mrb[0].mxu0 %v766
      %v897 = vpop.f32.mrb[0].mxu0
      %v898 = vadd.f32 %v736, %v897
      %v899 = vpop.f32.mrb[0].mxu0
      %900 = vmatprep.mubr.f32.mxu0 0.0
      %901 = vmatmul.mubr.f32.gmra.mrb[0].mxu0 %v769
      %v902 = vpop.f32.mrb[0].mxu0
      %v903 = vadd.f32 %v736, %v902
      %v904 = vpop.f32.mrb[0].mxu0
      %905 = vmatprep.mubr.f32.mxu0 0.0
      %906 = vmatmul.mubr.f32.gmra.mrb[0].mxu0 %v772
      %v907 = vpop.f32.mrb[0].mxu0
      %v908 = vadd.f32 %v736, %v907
      %v909 = vpop.f32.mrb[0].mxu0
      %910 = vmatprep.mubr.f32.mxu0 0.0
      %911 = vmatmul.mubr.f32.gmra.mrb[0].mxu0 %v775
      %v912 = vpop.f32.mrb[0].mxu0
      %v913 = vadd.f32 %v736, %v912
      %v914 = vpop.f32.mrb[0].mxu0
      %915 = vmatprep.mubr.f32.mxu0 0.0
      %916 = vmatmul.mubr.f32.gmra.mrb[0].mxu0 %v778
      %v917 = vpop.f32.mrb[0].mxu0
      %v918 = vadd.f32 %v736, %v917
      %v919 = vpop.f32.mrb[0].mxu0
      %920 = vmatprep.mubr.f32.mxu0 0.0
      %921 = vmatmul.mubr.f32.gmra.mrb[0].mxu0 %v781
      %v922 = vpop.f32.mrb[0].mxu0
      %v923 = vadd.f32 %v736, %v922
      %v924 = vpop.f32.mrb[0].mxu0
      %925 = vmatprep.mubr.f32.mxu0 0.0
      %926 = vmatmul.mubr.f32.gmra.mrb[0].mxu0 %v784
      %v927 = vpop.f32.mrb[0].mxu0
      %v928 = vadd.f32 %v736, %v927
      %v929 = vpop.f32.mrb[0].mxu0
      %930 = vdwg.mxu0
      %v931 = vld [vmem:[%s342] sm:$0xff]
      %v932 = vld [vmem:[%s342 + $0x8] sm:$0xff]
      %v933 = vld [vmem:[%s342 + $0x10] sm:$0xff]
      %v934 = vld [vmem:[%s342 + $0x18] sm:$0xff]
      %v935 = vld [vmem:[%s342 + $0x20] sm:$0xff]
      %v936 = vld [vmem:[%s342 + $0x28] sm:$0xff]
      %v937 = vld [vmem:[%s342 + $0x30] sm:$0xff]
      %v938 = vld [vmem:[%s342 + $0x38] sm:$0xff]
      %v939 = vld [vmem:[%s342 + $0x40] sm:$0xff]
      %v940 = vld [vmem:[%s342 + $0x48] sm:$0xff]
      %v941 = vld [vmem:[%s342 + $0x50] sm:$0xff]
      %v942 = vld [vmem:[%s342 + $0x58] sm:$0xff]
      %v943 = vld [vmem:[%s342 + $0x60] sm:$0xff]
      %v944 = vld [vmem:[%s342 + $0x68] sm:$0xff]
      %v945 = vld [vmem:[%s342 + $0x70] sm:$0xff]
      %v946 = vld [vmem:[%s342 + $0x78] sm:$0xff]
      %v947 = vunpack.c.l.bf16 %v931
      %v948 = vunpack.c.h.bf16 %v931
      %v949 = vunpack.c.l.bf16 %v932
      %v950 = vunpack.c.h.bf16 %v932
      %v951 = vunpack.c.l.bf16 %v933
      %v952 = vunpack.c.h.bf16 %v933
      %v953 = vunpack.c.l.bf16 %v934
      %v954 = vunpack.c.h.bf16 %v934
      %v955 = vunpack.c.l.bf16 %v935
      %v956 = vunpack.c.h.bf16 %v935
      %v957 = vunpack.c.l.bf16 %v936
      %v958 = vunpack.c.h.bf16 %v936
      %v959 = vunpack.c.l.bf16 %v937
      %v960 = vunpack.c.h.bf16 %v937
      %v961 = vunpack.c.l.bf16 %v938
      %v962 = vunpack.c.h.bf16 %v938
      %v963 = vunpack.c.l.bf16 %v939
      %v964 = vunpack.c.h.bf16 %v939
      %v965 = vunpack.c.l.bf16 %v940
      %v966 = vunpack.c.h.bf16 %v940
      %v967 = vunpack.c.l.bf16 %v941
      %v968 = vunpack.c.h.bf16 %v941
      %v969 = vunpack.c.l.bf16 %v942
      %v970 = vunpack.c.h.bf16 %v942
      %v971 = vunpack.c.l.bf16 %v943
      %v972 = vunpack.c.h.bf16 %v943
      %v973 = vunpack.c.l.bf16 %v944
      %v974 = vunpack.c.h.bf16 %v944
      %v975 = vunpack.c.l.bf16 %v945
      %v976 = vunpack.c.h.bf16 %v945
      %v977 = vunpack.c.l.bf16 %v946
      %v978 = vunpack.c.h.bf16 %v946
      %v979 = vmul.f32 %v947, %v513
      %v980 = vmul.f32 %v948, %v515
      %v981 = vmul.f32 %v949, %v517
      %v982 = vmul.f32 %v950, %v519
      %v983 = vmul.f32 %v951, %v523
      %v984 = vmul.f32 %v952, %v525
      %v985 = vmul.f32 %v953, %v527
      %v986 = vmul.f32 %v954, %v529
      %v987 = vmul.f32 %v955, %v533
      %v988 = vmul.f32 %v956, %v535
      %v989 = vmul.f32 %v957, %v537
      %v990 = vmul.f32 %v958, %v539
      %v991 = vmul.f32 %v959, %v543
      %v992 = vmul.f32 %v960, %v545
      %v993 = vmul.f32 %v961, %v547
      %v994 = vmul.f32 %v962, %v549
      %v995 = vmul.f32 %v963, %v553
      %v996 = vmul.f32 %v964, %v555
      %v997 = vmul.f32 %v965, %v557
      %v998 = vmul.f32 %v966, %v559
      %v999 = vmul.f32 %v967, %v563
      %v1000 = vmul.f32 %v968, %v565
      %v1001 = vmul.f32 %v969, %v567
      %v1002 = vmul.f32 %v970, %v569
      %v1003 = vmul.f32 %v971, %v573
      %v1004 = vmul.f32 %v972, %v575
      %v1005 = vmul.f32 %v973, %v577
      %v1006 = vmul.f32 %v974, %v579
      %v1007 = vmul.f32 %v975, %v583
      %v1008 = vmul.f32 %v976, %v585
      %v1009 = vmul.f32 %v977, %v587
      %v1010 = vmul.f32 %v978, %v589
      %v1011 = vld [vmem:[%s7] sm:$0xff]
      %v1012 = vld [vmem:[%s7 + $0x8] sm:$0xff]
      %v1013 = vld [vmem:[%s7 + $0x10] sm:$0xff]
      %v1014 = vld [vmem:[%s7 + $0x18] sm:$0xff]
      %v1015 = vld [vmem:[%s7 + $0x20] sm:$0xff]
      %v1016 = vld [vmem:[%s7 + $0x28] sm:$0xff]
      %v1017 = vld [vmem:[%s7 + $0x30] sm:$0xff]
      %v1018 = vld [vmem:[%s7 + $0x38] sm:$0xff]
      %v1019 = vld [vmem:[%s7 + $0x40] sm:$0xff]
      %v1020 = vld [vmem:[%s7 + $0x48] sm:$0xff]
      %v1021 = vld [vmem:[%s7 + $0x50] sm:$0xff]
      %v1022 = vld [vmem:[%s7 + $0x58] sm:$0xff]
      %v1023 = vld [vmem:[%s7 + $0x60] sm:$0xff]
      %v1024 = vld [vmem:[%s7 + $0x68] sm:$0xff]
      %v1025 = vld [vmem:[%s7 + $0x70] sm:$0xff]
      %v1026 = vld [vmem:[%s7 + $0x78] sm:$0xff]
      %v1027 = vld [vmem:[%s7 + $0x80] sm:$0xff]
      %v1028 = vld [vmem:[%s7 + $0x88] sm:$0xff]
      %v1029 = vld [vmem:[%s7 + $0x90] sm:$0xff]
      %v1030 = vld [vmem:[%s7 + $0x98] sm:$0xff]
      %v1031 = vld [vmem:[%s7 + $0xa0] sm:$0xff]
      %v1032 = vld [vmem:[%s7 + $0xa8] sm:$0xff]
      %v1033 = vld [vmem:[%s7 + $0xb0] sm:$0xff]
      %v1034 = vld [vmem:[%s7 + $0xb8] sm:$0xff]
      %v1035 = vld [vmem:[%s7 + $0xc0] sm:$0xff]
      %v1036 = vld [vmem:[%s7 + $0xc8] sm:$0xff]
      %v1037 = vld [vmem:[%s7 + $0xd0] sm:$0xff]
      %v1038 = vld [vmem:[%s7 + $0xd8] sm:$0xff]
      %v1039 = vld [vmem:[%s7 + $0xe0] sm:$0xff]
      %v1040 = vld [vmem:[%s7 + $0xe8] sm:$0xff]
      %v1041 = vld [vmem:[%s7 + $0xf0] sm:$0xff]
      %v1042 = vld [vmem:[%s7 + $0xf8] sm:$0xff]
      %1043 = vmatprep.subr.mxu0 0.0
      %1044 = vmatpush1.msra.mxu0 %v1011
      %1045 = vmatprep.subr.mxu0 0.0
      %1046 = vmatpush1.msra.mxu0 %v1012
      %1047 = vmatprep.subr.mxu0 0.0
      %1048 = vmatpush1.msra.mxu0 %v1013
      %1049 = vmatprep.subr.mxu0 0.0
      %1050 = vmatpush1.msra.mxu0 %v1014
      %1051 = vmatprep.subr.mxu0 0.0
      %1052 = vmatpush1.msra.mxu0 %v1015
      %1053 = vmatprep.subr.mxu0 0.0
      %1054 = vmatpush1.msra.mxu0 %v1016
      %1055 = vmatprep.subr.mxu0 0.0
      %1056 = vmatpush1.msra.mxu0 %v1017
      %1057 = vmatprep.subr.mxu0 0.0
      %1058 = vmatpush1.msra.mxu0 %v1018
      %1059 = vmatprep.subr.mxu0 0.0
      %1060 = vmatpush1.msra.mxu0 %v1019
      %1061 = vmatprep.subr.mxu0 0.0
      %1062 = vmatpush1.msra.mxu0 %v1020
      %1063 = vmatprep.subr.mxu0 0.0
      %1064 = vmatpush1.msra.mxu0 %v1021
      %1065 = vmatprep.subr.mxu0 0.0
      %1066 = vmatpush1.msra.mxu0 %v1022
      %1067 = vmatprep.subr.mxu0 0.0
      %1068 = vmatpush1.msra.mxu0 %v1023
      %1069 = vmatprep.subr.mxu0 0.0
      %1070 = vmatpush1.msra.mxu0 %v1024
      %1071 = vmatprep.subr.mxu0 0.0
      %1072 = vmatpush1.msra.mxu0 %v1025
      %1073 = vmatprep.subr.mxu0 0.0
      %1074 = vmatpush1.msra.mxu0 %v1026
      %1075 = vmatprep.subr.mxu0 0.0
      %1076 = vmatpush1.msra.mxu0 %v1027
      %1077 = vmatprep.subr.mxu0 0.0
      %1078 = vmatpush1.msra.mxu0 %v1028
      %1079 = vmatprep.subr.mxu0 0.0
      %1080 = vmatpush1.msra.mxu0 %v1029
      %1081 = vmatprep.subr.mxu0 0.0
      %1082 = vmatpush1.msra.mxu0 %v1030
      %1083 = vmatprep.subr.mxu0 0.0
      %1084 = vmatpush1.msra.mxu0 %v1031
      %1085 = vmatprep.subr.mxu0 0.0
      %1086 = vmatpush1.msra.mxu0 %v1032
      %1087 = vmatprep.subr.mxu0 0.0
      %1088 = vmatpush1.msra.mxu0 %v1033
      %1089 = vmatprep.subr.mxu0 0.0
      %1090 = vmatpush1.msra.mxu0 %v1034
      %1091 = vmatprep.subr.mxu0 0.0
      %1092 = vmatpush1.msra.mxu0 %v1035
      %1093 = vmatprep.subr.mxu0 0.0
      %1094 = vmatpush1.msra.mxu0 %v1036
      %1095 = vmatprep.subr.mxu0 0.0
      %1096 = vmatpush1.msra.mxu0 %v1037
      %1097 = vmatprep.subr.mxu0 0.0
      %1098 = vmatpush1.msra.mxu0 %v1038
      %1099 = vmatprep.subr.mxu0 0.0
      %1100 = vmatpush1.msra.mxu0 %v1039
      %1101 = vmatprep.subr.mxu0 0.0
      %1102 = vmatpush1.msra.mxu0 %v1040
      %1103 = vmatprep.subr.mxu0 0.0
      %1104 = vmatpush1.msra.mxu0 %v1041
      %1105 = vmatprep.subr.mxu0 0.0
      %1106 = vmatpush1.msra.mxu0 %v1042
      %1107 = vmatprep.mubr.f32.mxu0 %v980
      %1108 = vmatmul.mubr.f32.gmra.mrb[0].mxu0 %v979
      %v1109 = vpop.f32.mrb[0].mxu0
      %v1110 = vadd.f32 0.0, %v1109
      %v1111 = vpop.f32.mrb[0].mxu0
      %1112 = vmatprep.mubr.f32.mxu0 %v982
      %1113 = vmatmul.mubr.f32.gmra.mrb[0].mxu0 %v981
      %v1114 = vpop.f32.mrb[0].mxu0
      %v1115 = vadd.f32 0.0, %v1114
      %v1116 = vpop.f32.mrb[0].mxu0
      %1117 = vmatprep.mubr.f32.mxu0 %v984
      %1118 = vmatmul.mubr.f32.gmra.mrb[0].mxu0 %v983
      %v1119 = vpop.f32.mrb[0].mxu0
      %v1120 = vadd.f32 0.0, %v1119
      %v1121 = vpop.f32.mrb[0].mxu0
      %1122 = vmatprep.mubr.f32.mxu0 %v986
      %1123 = vmatmul.mubr.f32.gmra.mrb[0].mxu0 %v985
      %v1124 = vpop.f32.mrb[0].mxu0
      %v1125 = vadd.f32 0.0, %v1124
      %v1126 = vpop.f32.mrb[0].mxu0
      %1127 = vmatprep.mubr.f32.mxu0 %v988
      %1128 = vmatmul.mubr.f32.gmra.mrb[0].mxu0 %v987
      %v1129 = vpop.f32.mrb[0].mxu0
      %v1130 = vadd.f32 0.0, %v1129
      %v1131 = vpop.f32.mrb[0].mxu0
      %1132 = vmatprep.mubr.f32.mxu0 %v990
      %1133 = vmatmul.mubr.f32.gmra.mrb[0].mxu0 %v989
      %v1134 = vpop.f32.mrb[0].mxu0
      %v1135 = vadd.f32 0.0, %v1134
      %v1136 = vpop.f32.mrb[0].mxu0
      %1137 = vmatprep.mubr.f32.mxu0 %v992
      %1138 = vmatmul.mubr.f32.gmra.mrb[0].mxu0 %v991
      %v1139 = vpop.f32.mrb[0].mxu0
      %v1140 = vadd.f32 0.0, %v1139
      %v1141 = vpop.f32.mrb[0].mxu0
      %1142 = vmatprep.mubr.f32.mxu0 %v994
      %1143 = vmatmul.mubr.f32.gmra.mrb[0].mxu0 %v993
      %v1144 = vpop.f32.mrb[0].mxu0
      %v1145 = vadd.f32 0.0, %v1144
      %v1146 = vpop.f32.mrb[0].mxu0
      %1147 = vmatprep.mubr.f32.mxu0 %v996
      %1148 = vmatmul.mubr.f32.gmra.mrb[0].mxu0 %v995
      %v1149 = vpop.f32.mrb[0].mxu0
      %v1150 = vadd.f32 0.0, %v1149
      %v1151 = vpop.f32.mrb[0].mxu0
      %1152 = vmatprep.mubr.f32.mxu0 %v998
      %1153 = vmatmul.mubr.f32.gmra.mrb[0].mxu0 %v997
      %v1154 = vpop.f32.mrb[0].mxu0
      %v1155 = vadd.f32 0.0, %v1154
      %v1156 = vpop.f32.mrb[0].mxu0
      %1157 = vmatprep.mubr.f32.mxu0 %v1000
      %1158 = vmatmul.mubr.f32.gmra.mrb[0].mxu0 %v999
      %v1159 = vpop.f32.mrb[0].mxu0
      %v1160 = vadd.f32 0.0, %v1159
      %v1161 = vpop.f32.mrb[0].mxu0
      %1162 = vmatprep.mubr.f32.mxu0 %v1002
      %1163 = vmatmul.mubr.f32.gmra.mrb[0].mxu0 %v1001
      %v1164 = vpop.f32.mrb[0].mxu0
      %v1165 = vadd.f32 0.0, %v1164
      %v1166 = vpop.f32.mrb[0].mxu0
      %1167 = vmatprep.mubr.f32.mxu0 %v1004
      %1168 = vmatmul.mubr.f32.gmra.mrb[0].mxu0 %v1003
      %v1169 = vpop.f32.mrb[0].mxu0
      %v1170 = vadd.f32 0.0, %v1169
      %v1171 = vpop.f32.mrb[0].mxu0
      %1172 = vmatprep.mubr.f32.mxu0 %v1006
      %1173 = vmatmul.mubr.f32.gmra.mrb[0].mxu0 %v1005
      %v1174 = vpop.f32.mrb[0].mxu0
      %v1175 = vadd.f32 0.0, %v1174
      %v1176 = vpop.f32.mrb[0].mxu0
      %1177 = vmatprep.mubr.f32.mxu0 %v1008
      %1178 = vmatmul.mubr.f32.gmra.mrb[0].mxu0 %v1007
      %v1179 = vpop.f32.mrb[0].mxu0
      %v1180 = vadd.f32 0.0, %v1179
      %v1181 = vpop.f32.mrb[0].mxu0
      %1182 = vmatprep.mubr.f32.mxu0 %v1010
      %1183 = vmatmul.mubr.f32.gmra.mrb[0].mxu0 %v1009
      %v1184 = vpop.f32.mrb[0].mxu0
      %v1185 = vadd.f32 0.0, %v1184
      %v1186 = vpop.f32.mrb[0].mxu0
      %1187 = vdwg.mxu0
      %v1188 = vld [vmem:[%s348] sm:$0xff]
      %v1189 = vld [vmem:[%s348 + $0x8] sm:$0xff]
      %v1190 = vld [vmem:[%s348 + $0x10] sm:$0xff]
      %v1191 = vld [vmem:[%s348 + $0x18] sm:$0xff]
      %v1192 = vld [vmem:[%s348 + $0x20] sm:$0xff]
      %v1193 = vld [vmem:[%s348 + $0x28] sm:$0xff]
      %v1194 = vld [vmem:[%s348 + $0x30] sm:$0xff]
      %v1195 = vld [vmem:[%s348 + $0x38] sm:$0xff]
      %v1196 = vld [vmem:[%s348 + $0x40] sm:$0xff]
      %v1197 = vld [vmem:[%s348 + $0x48] sm:$0xff]
      %v1198 = vld [vmem:[%s348 + $0x50] sm:$0xff]
      %v1199 = vld [vmem:[%s348 + $0x58] sm:$0xff]
      %v1200 = vld [vmem:[%s348 + $0x60] sm:$0xff]
      %v1201 = vld [vmem:[%s348 + $0x68] sm:$0xff]
      %v1202 = vld [vmem:[%s348 + $0x70] sm:$0xff]
      %v1203 = vld [vmem:[%s348 + $0x78] sm:$0xff]
      %vm1204 = vcmp.gt.f32.partialorder %v1188, 0.0
      %vm1205 = vcmp.gt.f32.partialorder %v1189, 0.0
      %vm1206 = vcmp.gt.f32.partialorder %v1190, 0.0
      %vm1207 = vcmp.gt.f32.partialorder %v1191, 0.0
      %vm1208 = vcmp.gt.f32.partialorder %v1192, 0.0
      %vm1209 = vcmp.gt.f32.partialorder %v1193, 0.0
      %vm1210 = vcmp.gt.f32.partialorder %v1194, 0.0
      %vm1211 = vcmp.gt.f32.partialorder %v1195, 0.0
      %vm1212 = vcmp.gt.f32.partialorder %v1196, 0.0
      %vm1213 = vcmp.gt.f32.partialorder %v1197, 0.0
      %vm1214 = vcmp.gt.f32.partialorder %v1198, 0.0
      %vm1215 = vcmp.gt.f32.partialorder %v1199, 0.0
      %vm1216 = vcmp.gt.f32.partialorder %v1200, 0.0
      %vm1217 = vcmp.gt.f32.partialorder %v1201, 0.0
      %vm1218 = vcmp.gt.f32.partialorder %v1202, 0.0
      %vm1219 = vcmp.gt.f32.partialorder %v1203, 0.0
      %v1220 = vsel %vm1204, %v1110, -1e+09
      %v1221 = vsel %vm1205, %v1115, -1e+09
      %v1222 = vsel %vm1206, %v1120, -1e+09
      %v1223 = vsel %vm1207, %v1125, -1e+09
      %v1224 = vsel %vm1208, %v1130, -1e+09
      %v1225 = vsel %vm1209, %v1135, -1e+09
      %v1226 = vsel %vm1210, %v1140, -1e+09
      %v1227 = vsel %vm1211, %v1145, -1e+09
      %v1228 = vsel %vm1212, %v1150, -1e+09
      %v1229 = vsel %vm1213, %v1155, -1e+09
      %v1230 = vsel %vm1214, %v1160, -1e+09
      %v1231 = vsel %vm1215, %v1165, -1e+09
      %v1232 = vsel %vm1216, %v1170, -1e+09
      %v1233 = vsel %vm1217, %v1175, -1e+09
      %v1234 = vsel %vm1218, %v1180, -1e+09
      %v1235 = vsel %vm1219, %v1185, -1e+09
      %vm1236 = vcmask 7168
      %1237 = vst.msk [vmem:[%s354] sm:$0xff] %vm1236, 0.0
      %1238 = vst.msk [vmem:[%s354 + $0x8] sm:$0xff] %vm1236, 0.0
      %1239 = vst.msk [vmem:[%s354 + $0x10] sm:$0xff] %vm1236, 0.0
      %1240 = vst.msk [vmem:[%s354 + $0x18] sm:$0xff] %vm1236, 0.0
      %1241 = vst.msk [vmem:[%s354 + $0x20] sm:$0xff] %vm1236, 0.0
      %1242 = vst.msk [vmem:[%s354 + $0x28] sm:$0xff] %vm1236, 0.0
      %1243 = vst.msk [vmem:[%s354 + $0x30] sm:$0xff] %vm1236, 0.0
      %1244 = vst.msk [vmem:[%s354 + $0x38] sm:$0xff] %vm1236, 0.0
      %1245 = vst.msk [vmem:[%s354 + $0x40] sm:$0xff] %vm1236, 0.0
      %1246 = vst.msk [vmem:[%s354 + $0x48] sm:$0xff] %vm1236, 0.0
      %1247 = vst.msk [vmem:[%s354 + $0x50] sm:$0xff] %vm1236, 0.0
      %1248 = vst.msk [vmem:[%s354 + $0x58] sm:$0xff] %vm1236, 0.0
      %1249 = vst.msk [vmem:[%s354 + $0x60] sm:$0xff] %vm1236, 0.0
      %1250 = vst.msk [vmem:[%s354 + $0x68] sm:$0xff] %vm1236, 0.0
      %1251 = vst.msk [vmem:[%s354 + $0x70] sm:$0xff] %vm1236, 0.0
      %1252 = vst.msk [vmem:[%s354 + $0x78] sm:$0xff] %vm1236, 0.0
      %1269 = vrot.lane.b32.xlu0 %v853, 1
      %v1270 = vpop.permute.xlu0 %1269
      %1271 = vrot.lane.b32.xlu0 %v858, 1
      %v1272 = vpop.permute.xlu0 %1271
      %1273 = vrot.lane.b32.xlu0 %v863, 1
      %v1274 = vpop.permute.xlu0 %1273
      %1275 = vrot.lane.b32.xlu0 %v868, 1
      %v1276 = vpop.permute.xlu0 %1275
      %1277 = vrot.lane.b32.xlu0 %v873, 1
      %v1278 = vpop.permute.xlu0 %1277
      %1279 = vrot.lane.b32.xlu0 %v878, 1
      %v1280 = vpop.permute.xlu0 %1279
      %1281 = vrot.lane.b32.xlu0 %v883, 1
      %v1282 = vpop.permute.xlu0 %1281
      %1283 = vrot.lane.b32.xlu0 %v888, 1
      %v1284 = vpop.permute.xlu0 %1283
      %1285 = vrot.lane.b32.xlu0 %v893, 1
      %v1286 = vpop.permute.xlu0 %1285
      %1287 = vrot.lane.b32.xlu0 %v898, 1
      %v1288 = vpop.permute.xlu0 %1287
      %1289 = vrot.lane.b32.xlu0 %v903, 1
      %v1290 = vpop.permute.xlu0 %1289
      %1291 = vrot.lane.b32.xlu0 %v908, 1
      %v1292 = vpop.permute.xlu0 %1291
      %1293 = vrot.lane.b32.xlu0 %v913, 1
      %v1294 = vpop.permute.xlu0 %1293
      %1295 = vrot.lane.b32.xlu0 %v918, 1
      %v1296 = vpop.permute.xlu0 %1295
      %1297 = vrot.lane.b32.xlu0 %v923, 1
      %v1298 = vpop.permute.xlu0 %1297
      %1299 = vrot.lane.b32.xlu0 %v928, 1
      %v1300 = vpop.permute.xlu0 %1299
      %vm1317 = vcmask 48136
      %1318 = vst.msk [vmem:[%s354] sm:$0xff] %vm1317, %v1270
      %1319 = vst.msk [vmem:[%s354 + $0x8] sm:$0xff] %vm1317, %v1272
      %1320 = vst.msk [vmem:[%s354 + $0x10] sm:$0xff] %vm1317, %v1274
      %1321 = vst.msk [vmem:[%s354 + $0x18] sm:$0xff] %vm1317, %v1276
      %1322 = vst.msk [vmem:[%s354 + $0x20] sm:$0xff] %vm1317, %v1278
      %1323 = vst.msk [vmem:[%s354 + $0x28] sm:$0xff] %vm1317, %v1280
      %1324 = vst.msk [vmem:[%s354 + $0x30] sm:$0xff] %vm1317, %v1282
      %1325 = vst.msk [vmem:[%s354 + $0x38] sm:$0xff] %vm1317, %v1284
      %1326 = vst.msk [vmem:[%s354 + $0x40] sm:$0xff] %vm1317, %v1286
      %1327 = vst.msk [vmem:[%s354 + $0x48] sm:$0xff] %vm1317, %v1288
      %1328 = vst.msk [vmem:[%s354 + $0x50] sm:$0xff] %vm1317, %v1290
      %1329 = vst.msk [vmem:[%s354 + $0x58] sm:$0xff] %vm1317, %v1292
      %1330 = vst.msk [vmem:[%s354 + $0x60] sm:$0xff] %vm1317, %v1294
      %1331 = vst.msk [vmem:[%s354 + $0x68] sm:$0xff] %vm1317, %v1296
      %1332 = vst.msk [vmem:[%s354 + $0x70] sm:$0xff] %vm1317, %v1298
      %1333 = vst.msk [vmem:[%s354 + $0x78] sm:$0xff] %vm1317, %v1300
      %1350 = vrot.lane.b32.xlu0 %v1220, 6
      %v1351 = vpop.permute.xlu0 %1350
      %1352 = vrot.lane.b32.xlu0 %v1221, 6
      %v1353 = vpop.permute.xlu0 %1352
      %1354 = vrot.lane.b32.xlu0 %v1222, 6
      %v1355 = vpop.permute.xlu0 %1354
      %1356 = vrot.lane.b32.xlu0 %v1223, 6
      %v1357 = vpop.permute.xlu0 %1356
      %1358 = vrot.lane.b32.xlu0 %v1224, 6
      %v1359 = vpop.permute.xlu0 %1358
      %1360 = vrot.lane.b32.xlu0 %v1225, 6
      %v1361 = vpop.permute.xlu0 %1360
      %1362 = vrot.lane.b32.xlu0 %v1226, 6
      %v1363 = vpop.permute.xlu0 %1362
      %1364 = vrot.lane.b32.xlu0 %v1227, 6
      %v1365 = vpop.permute.xlu0 %1364
      %1366 = vrot.lane.b32.xlu0 %v1228, 6
      %v1367 = vpop.permute.xlu0 %1366
      %1368 = vrot.lane.b32.xlu0 %v1229, 6
      %v1369 = vpop.permute.xlu0 %1368
      %1370 = vrot.lane.b32.xlu0 %v1230, 6
      %v1371 = vpop.permute.xlu0 %1370
      %1372 = vrot.lane.b32.xlu0 %v1231, 6
      %v1373 = vpop.permute.xlu0 %1372
      %1374 = vrot.lane.b32.xlu0 %v1232, 6
      %v1375 = vpop.permute.xlu0 %1374
      %1376 = vrot.lane.b32.xlu0 %v1233, 6
      %v1377 = vpop.permute.xlu0 %1376
      %1378 = vrot.lane.b32.xlu0 %v1234, 6
      %v1379 = vpop.permute.xlu0 %1378
      %1380 = vrot.lane.b32.xlu0 %v1235, 6
      %v1381 = vpop.permute.xlu0 %1380
      %vm1398 = vcmask 113712
      %1399 = vst.msk [vmem:[%s354] sm:$0xff] %vm1398, %v1351
      %1400 = vst.msk [vmem:[%s354 + $0x8] sm:$0xff] %vm1398, %v1353
      %1401 = vst.msk [vmem:[%s354 + $0x10] sm:$0xff] %vm1398, %v1355
      %1402 = vst.msk [vmem:[%s354 + $0x18] sm:$0xff] %vm1398, %v1357
      %1403 = vst.msk [vmem:[%s354 + $0x20] sm:$0xff] %vm1398, %v1359
      %1404 = vst.msk [vmem:[%s354 + $0x28] sm:$0xff] %vm1398, %v1361
      %1405 = vst.msk [vmem:[%s354 + $0x30] sm:$0xff] %vm1398, %v1363
      %1406 = vst.msk [vmem:[%s354 + $0x38] sm:$0xff] %vm1398, %v1365
      %1407 = vst.msk [vmem:[%s354 + $0x40] sm:$0xff] %vm1398, %v1367
      %1408 = vst.msk [vmem:[%s354 + $0x48] sm:$0xff] %vm1398, %v1369
      %1409 = vst.msk [vmem:[%s354 + $0x50] sm:$0xff] %vm1398, %v1371
      %1410 = vst.msk [vmem:[%s354 + $0x58] sm:$0xff] %vm1398, %v1373
      %1411 = vst.msk [vmem:[%s354 + $0x60] sm:$0xff] %vm1398, %v1375
      %1412 = vst.msk [vmem:[%s354 + $0x68] sm:$0xff] %vm1398, %v1377
      %1413 = vst.msk [vmem:[%s354 + $0x70] sm:$0xff] %vm1398, %v1379
      %1414 = vst.msk [vmem:[%s354 + $0x78] sm:$0xff] %vm1398, %v1381
      %s1415 = smul.u32 16, %s19
      %p1416 = scmp.lt.s32.totalorder %s1415, 31
      %s1417 = scalar_select %p1416, %s1415, 31
      %s1418 = smul.addr %s1417, 8
      %s1419 = scalar_lea.vmem %s8, %s1418
      // Predicated region
      $region53: #{tpu_custom_call.1} parent=51 // pred_check
        %p1420 = pneg %p220
      $region54: #{tpu_custom_call.1} parent=51 // pred_check_branch
        %1422 = sbr.rel (%p1420) target = $region56
      $region55: #{tpu_custom_call.1} parent=51 // pred_region
        %s1423 = smul.u32 16, %s19
      $region56: #{tpu_custom_call.1} parent=51 // pred_fallthru
        _
    $region52: #{tpu_custom_call.1} parent=5 // pred_fallthru
      _
    %p1424 = scmp.le.s32.totalorder 2, %s14
    // Predicated region
    $region57: #{tpu_custom_call.1} parent=5 // pred_check
      %p1425 = pneg %p1424
    $region58: #{tpu_custom_call.1} parent=5 // pred_check_branch
      %1427 = sbr.rel (%p1425) target = $region60
    $region59: #{tpu_custom_call.1} parent=5 // pred_region
      %s1428 = ssub.s32 %s14, 2
      // Predicated region
      $region61: #{tpu_custom_call.1} parent=59 // pred_check
        %p1429 = pneg %p226
      $region62: #{tpu_custom_call.1} parent=59 // pred_check_branch
        %1431 = sbr.rel (%p1429) target = $region64
      $region63: #{tpu_custom_call.1} parent=59 // pred_region
        %s1432 = smul.u32 16, %s20
        %p1433 = scmp.lt.s32.totalorder %s1432, 31
        %s1434 = scalar_select %p1433, %s1432, 31
        %s1435 = smul.addr %s1434, 8
        %s1436 = scalar_lea.vmem %s8, %s1435
      $region64: #{tpu_custom_call.1} parent=59 // pred_fallthru
        _
    $region60: #{tpu_custom_call.1} parent=5 // pred_fallthru
      _
  $region6: #{tpu_custom_call.1} parent=0 // loop_footer
    %s18 = sadd.s32 1, %s14
  $region7: #{tpu_custom_call.1} parent=0 // loop_footer_branch
    %13 = sbr.rel target = $region3
  $region8: #{tpu_custom_call.1} parent=0 // loop_exit
    _

</llo_original>
